<compile_context>
chip_gen: v7x
topology: tpu7x:2x2x1
jax: 0.10.0
libtpu: 0.0.40
codegen_flags: <defaults>
</compile_context>

<pallas_src>
import functools

import jax
import jax.numpy as jnp
from jax.experimental import pallas as pl
from jax.experimental.pallas import tpu as pltpu

_NSEM = 8  # round-robin DMA semaphore pool used within one grid step


def _embed_kernel(ids_ref, table_ref, o_ref, buf_ref, sems, *, tm):
    # ids_ref  : SMEM (m_pad,) int32      (scalar prefetch)
    # table_ref: HBM  (vocab, dp)         (memory_space=pl.ANY, manual DMA)
    # o_ref    : VMEM (tm, dp) output tile
    # buf_ref  : VMEM (tm, dp) gather scratch
    # sems     : DMA semaphores (_NSEM,)
    base = pl.program_id(0) * tm

    # Issue all row-gather DMAs for this tile (kept in flight concurrently).
    @pl.loop(0, tm)
    def _start(r):
        tok = ids_ref[base + r]
        pltpu.make_async_copy(table_ref.at[tok], buf_ref.at[r],
                              sems.at[r % _NSEM]).start()

    # Wait for every row.  Only the transfer size / semaphore matter for wait(),
    # so a constant source row avoids re-reading SMEM here.
    @pl.loop(0, tm)
    def _wait(r):
        pltpu.make_async_copy(table_ref.at[0], buf_ref.at[r],
                              sems.at[r % _NSEM]).wait()

    # Lane-dense store of the gathered tile.
    o_ref[...] = buf_ref[...]


@functools.partial(jax.jit, static_argnames=("tm",))
def embedder(ids, table, *, tm=128):
    """ids: int[...]   table: [vocab_size, d_model]   ->   [..., d_model]"""
    assert tm % 8 == 0, "row tile must respect the (8, 128) sublane constraint"
    vocab_size, d_model = table.shape
    orig_shape = ids.shape

    flat = ids.reshape(-1).astype(jnp.int32)
    m = flat.shape[0]
    m_pad = ((m + tm - 1) // tm) * tm
    if m_pad != m:
        flat = jnp.pad(flat, (0, m_pad - m))          # pad with token id 0 (always valid)

    dp = ((d_model + 127) // 128) * 128               # lane-dense last dim
    if dp != d_model:
        # TODO(synk): in a real model store the table pre-padded to a multiple of
        # 128 lanes so this per-call pad copy disappears.
        table = jnp.pad(table, ((0, 0), (0, dp - d_model)))

    bytes_accessed = int(2 * m_pad * dp * table.dtype.itemsize + 4 * m_pad)

    out = pl.pallas_call(
        functools.partial(_embed_kernel, tm=tm),
        out_shape=jax.ShapeDtypeStruct((m_pad, dp), table.dtype),
        grid_spec=pltpu.PrefetchScalarGridSpec(
            num_scalar_prefetch=1,                    # token ids -> SMEM
            grid=(m_pad // tm,),
            in_specs=[pl.BlockSpec(memory_space=pl.ANY)],   # table stays in HBM
            out_specs=pl.BlockSpec((tm, dp), lambda i, ids: (i, 0)),
            scratch_shapes=[pltpu.VMEM((tm, dp), table.dtype),
                            pltpu.SemaphoreType.DMA((_NSEM,))]),
        compiler_params=pltpu.CompilerParams(
            dimension_semantics=("parallel",)),
        cost_estimate=pl.CostEstimate(flops=0, transcendentals=0,
                                      bytes_accessed=bytes_accessed),
    )(flat, table)

    out = out[:m, :d_model]
    return out.reshape(*orig_shape, d_model)


if __name__ == "__main__":
    vocab_size, d_model = 1000, 128   # d_model kept lane-dense (multiple of 128)
    batch, seq = 2, 8

    key = jax.random.PRNGKey(0)
    k_ids, k_tab = jax.random.split(key)
    ids = jax.random.randint(k_ids, (batch, seq), 0, vocab_size, dtype=jnp.int32)
    table = jax.random.normal(k_tab, (vocab_size, d_model), jnp.float32)

    out = embedder(ids, table, tm=16)   # 16 tokens -> one exact tile for the demo
    out = jax.block_until_ready(out)

    ref = table[ids]                    # pure-JAX gather reference
    assert out.shape == (batch, seq, d_model)
    assert jnp.array_equal(out, ref)

    print("KERNEL_OK")
</pallas_src>

<mosaic_0001>
module attributes {stable_mosaic.version = 11 : i64} {
  func.func @_embed_kernel(%arg0: i32, %arg1: memref<16xi32, #tpu.memory_space<smem>>, %arg2: memref<1000x128xf32, #tpu.memory_space<any>>, %arg3: memref<16x128xf32, #tpu.memory_space<vmem>>, %arg4: memref<16x128xf32, #tpu.memory_space<vmem>>, %arg5: memref<8x!tpu.dma_semaphore, #tpu.memory_space<semaphore_mem>>) attributes {dimension_semantics = [#tpu.dimension_semantics<parallel>], iteration_bounds = array<i64: 1>, scalar_prefetch = 1 : i64, scratch_operands = 2 : i64, tpu.core_type = #tpu.core_type<tc>, window_params = [{}, {transform_indices = @transform_1, window_bounds = array<i64: 16, 128>}]} {
    %c16_i32 = arith.constant 16 : i32
    %0 = arith.muli %arg0, %c16_i32 : i32
    %c0_i32 = arith.constant 0 : i32
    %c16_i32_0 = arith.constant 16 : i32
    %1 = arith.addi %c0_i32, %c16_i32_0 : i32
    %c1_i32 = arith.constant 1 : i32
    scf.for %arg6 = %c0_i32 to %1 step %c1_i32  : i32 {
      %c1_i32_9 = arith.constant 1 : i32
      %5 = arith.muli %arg6, %c1_i32_9 : i32
      %c0_i32_10 = arith.constant 0 : i32
      %6 = arith.addi %c0_i32_10, %5 : i32
      %7 = arith.addi %0, %6 : i32
      %8 = arith.index_cast %7 : i32 to index
      %9 = memref.load %arg1[%8] : memref<16xi32, #tpu.memory_space<smem>>
      %c8_i32 = arith.constant 8 : i32
      %c0_i32_11 = arith.constant 0 : i32
      %10 = arith.cmpi eq, %c8_i32, %c0_i32_11 : i32
      %c1_i32_12 = arith.constant 1 : i32
      %11 = arith.select %10, %c1_i32_12, %c8_i32 : i32
      %12 = arith.remsi %6, %11 : i32
      %c0_i32_13 = arith.constant 0 : i32
      %13 = arith.cmpi ne, %12, %c0_i32_13 : i32
      %c0_i32_14 = arith.constant 0 : i32
      %14 = arith.cmpi slt, %12, %c0_i32_14 : i32
      %c0_i32_15 = arith.constant 0 : i32
      %15 = arith.cmpi slt, %11, %c0_i32_15 : i32
      %16 = arith.xori %14, %15 : i1
      %17 = arith.andi %16, %13 : i1
      %18 = arith.addi %12, %11 : i32
      %19 = arith.select %17, %18, %12 : i32
      %c0_i32_16 = arith.constant 0 : i32
      %20 = tpu.memref_slice %arg2[%9, %c0_i32_16] : memref<1000x128xf32, #tpu.memory_space<any>> -> memref<1x128xf32, #tpu.memory_space<any>>
      %21 = tpu.memref_squeeze %20 : memref<1x128xf32, #tpu.memory_space<any>> -> memref<128xf32, #tpu.memory_space<any>>
      %c0_i32_17 = arith.constant 0 : i32
      %22 = tpu.memref_slice %arg4[%6, %c0_i32_17] : memref<16x128xf32, #tpu.memory_space<vmem>> -> memref<1x128xf32, #tpu.memory_space<vmem>>
      %23 = tpu.memref_squeeze %22 : memref<1x128xf32, #tpu.memory_space<vmem>> -> memref<128xf32, #tpu.memory_space<vmem>>
      %24 = tpu.memref_slice %arg5[%19] : memref<8x!tpu.dma_semaphore, #tpu.memory_space<semaphore_mem>> -> memref<1x!tpu.dma_semaphore, #tpu.memory_space<semaphore_mem>>
      %25 = tpu.memref_squeeze %24 : memref<1x!tpu.dma_semaphore, #tpu.memory_space<semaphore_mem>> -> memref<!tpu.dma_semaphore, #tpu.memory_space<semaphore_mem>>
      tpu.enqueue_dma source(%21 : memref<128xf32, #tpu.memory_space<any>>) target(%23 : memref<128xf32, #tpu.memory_space<vmem>>) target_semaphore(%25 : memref<!tpu.dma_semaphore, #tpu.memory_space<semaphore_mem>>)
    }
    %c16_i32_1 = arith.constant 16 : i32
    %c0_i32_2 = arith.constant 0 : i32
    %c16_i32_3 = arith.constant 16 : i32
    %2 = arith.addi %c0_i32_2, %c16_i32_3 : i32
    %c1_i32_4 = arith.constant 1 : i32
    scf.for %arg6 = %c0_i32_2 to %2 step %c1_i32_4  : i32 {
      %c1_i32_9 = arith.constant 1 : i32
      %5 = arith.muli %arg6, %c1_i32_9 : i32
      %c0_i32_10 = arith.constant 0 : i32
      %6 = arith.addi %c0_i32_10, %5 : i32
      %c8_i32 = arith.constant 8 : i32
      %c0_i32_11 = arith.constant 0 : i32
      %7 = arith.cmpi eq, %c8_i32, %c0_i32_11 : i32
      %c1_i32_12 = arith.constant 1 : i32
      %8 = arith.select %7, %c1_i32_12, %c8_i32 : i32
      %9 = arith.remsi %6, %8 : i32
      %c0_i32_13 = arith.constant 0 : i32
      %10 = arith.cmpi ne, %9, %c0_i32_13 : i32
      %c0_i32_14 = arith.constant 0 : i32
      %11 = arith.cmpi slt, %9, %c0_i32_14 : i32
      %c0_i32_15 = arith.constant 0 : i32
      %12 = arith.cmpi slt, %8, %c0_i32_15 : i32
      %13 = arith.xori %11, %12 : i1
      %14 = arith.andi %13, %10 : i1
      %15 = arith.addi %9, %8 : i32
      %16 = arith.select %14, %15, %9 : i32
      %c0_i32_16 = arith.constant 0 : i32
      %c0_i32_17 = arith.constant 0 : i32
      %17 = tpu.memref_slice %arg2[%c0_i32_16, %c0_i32_17] : memref<1000x128xf32, #tpu.memory_space<any>> -> memref<1x128xf32, #tpu.memory_space<any>>
      %18 = tpu.memref_squeeze %17 : memref<1x128xf32, #tpu.memory_space<any>> -> memref<128xf32, #tpu.memory_space<any>>
      %c0_i32_18 = arith.constant 0 : i32
      %19 = tpu.memref_slice %arg4[%6, %c0_i32_18] : memref<16x128xf32, #tpu.memory_space<vmem>> -> memref<1x128xf32, #tpu.memory_space<vmem>>
      %20 = tpu.memref_squeeze %19 : memref<1x128xf32, #tpu.memory_space<vmem>> -> memref<128xf32, #tpu.memory_space<vmem>>
      %21 = tpu.memref_slice %arg5[%16] : memref<8x!tpu.dma_semaphore, #tpu.memory_space<semaphore_mem>> -> memref<1x!tpu.dma_semaphore, #tpu.memory_space<semaphore_mem>>
      %22 = tpu.memref_squeeze %21 : memref<1x!tpu.dma_semaphore, #tpu.memory_space<semaphore_mem>> -> memref<!tpu.dma_semaphore, #tpu.memory_space<semaphore_mem>>
      tpu.wait_dma2 semaphore(%22 : memref<!tpu.dma_semaphore, #tpu.memory_space<semaphore_mem>>) src(%18 : memref<128xf32, #tpu.memory_space<any>>) dst(%20 : memref<128xf32, #tpu.memory_space<vmem>>)
    }
    %c16_i32_5 = arith.constant 16 : i32
    %c0 = arith.constant 0 : index
    %c0_6 = arith.constant 0 : index
    %3 = vector.load %arg4[%c0, %c0_6] : memref<16x128xf32, #tpu.memory_space<vmem>>, vector<16x128xf32>
    %c0_7 = arith.constant 0 : index
    %c0_8 = arith.constant 0 : index
    %4 = vector.load %arg3[%c0_7, %c0_8] : memref<16x128xf32, #tpu.memory_space<vmem>>, vector<16x128xf32>
    tpu.vector_store %arg3[%c0_7, %c0_8], %3 {strides = array<i32>} : memref<16x128xf32, #tpu.memory_space<vmem>>, vector<16x128xf32>,
    return
  }
  func.func @transform_1(%arg0: i32, %arg1: memref<16xi32, #tpu.memory_space<smem>>) -> (i32, i32) {
    %c0_i32 = arith.constant 0 : i32
    %c0_i32_0 = arith.constant 0 : i32
    return %arg0, %c0_i32 : i32, i32
  }
}

</mosaic_0001>

<llo_original>
// kernel: embedder.1
$region0: #{embedder.1}
  #allocation0 [shape = 'u32[]', space=smem, size = 0x4, offset = 0x4, fixed_abs, tag = 'smem constant byte address 0x4 - core index']
  #allocation1 [shape = 'u32[144,128]{1,0:T(1,128)}', space=vmem, size = 0x12000, scoped, tag = 'internal scratch']
  #allocation2 [shape = 'f32[16,128]{1,0:T(8,128)}', space=vmem, size = 0x2000, scoped, tag = 'scratch operand']
  #allocation3 [shape = 's32[8]{0}', space=sflag, size = 0x20, scoped, tag = 'scratch operand']
  #allocation4 [shape = 's32[1]{0}', space=sflag, size = 0x4, scoped, tag = 'scoped memory for embedder.1']
  #allocation5 [shape = 'u8[512]{0}', space=smem, size = 0x200, scoped, tag = 'prefetched SMEM operand 0']
  #allocation8 [shape = 's32[]', space=sflag, size = 0x4, offset = 0, fixed_abs, tag = 'sflag constant byte address 0x0 - dummy sync flag']
  #allocation9 [shape = 's32[]', space=sflag, size = 0x4, offset = 0, fixed_abs, tag = 'sflag constant byte address 0x0 - dummy sync flag']
  #allocation10 [shape = 'u32[]', space=smem, size = 0x4, offset = 0x44, fixed_abs, tag = 'smem constant byte address 0x44 - assertion arg 0']
  #allocation11 [shape = 'u32[]', space=smem, size = 0x4, offset = 0x48, fixed_abs, tag = 'smem constant byte address 0x48 - assertion arg 1']
  %s0 = inlined_call_operand.vmem [shape: s32[16], index: 0, kind: input, shape index: {}]
  %s1 = inlined_call_operand.hbm [shape: f32[1000,128], index: 1, kind: input, shape index: {}]
  %s2 = inlined_call_operand.hbm [shape: f32[16,128], index: 2, kind: output, shape index: {}]
  %s3 = sld [smem:[#allocation0]]
  $region28: #{embedder.1} parent=0
    _
  %s5 = ssub.s32 1, %s3
  %s6 = scalar_select 0, %s5, %s3
  %s7 = sshll.u32 %s0, 4
  %s8 = int_to_ptr.vmem [resolvable:$true] %s7
  %10 = dma.vmem_to_smem %s8, 16, [#allocation5], [#allocation4]
  %11 = dma.done [#allocation4], 16
  %12 = sfence
  $region1: #{embedder.1} parent=0
    #allocation6 [shape = 'u8[8192]{0}', space=vmem, size = 0x2000, scoped, tag = 'output window, operand 0, single buffered']
    #allocation7 [shape = 's32[1]{0}', space=sflag, size = 0x4, scoped, tag = 'scoped memory for embedder.1']
    %13 = vsyncpa [#allocation7], 0
    %s14 = smul.u32 0, 16
    loop: start=0, step=1, limit=16
    $region2: #{embedder.1} parent=1 // loop_pre_header
      _
    $region3: #{embedder.1} parent=1 // loop_header
      %s16 = sphi 0, %s20
      %p17 = scmp.ge.s32.totalorder %s16, 16
    $region4: #{embedder.1} parent=1 // loop_header_branch
      %19 = sbr.rel (%p17) target = $region8
    $region5: #{embedder.1} parent=1 // loop_body
      %s21 = sadd.s32 %s14, %s16
      %s22 = sld [smem:[#allocation5 + %s21]]
      %p23 = scmp.lt.s32.totalorder %s16, 0
      %s24 = ssub.s32 0, %s16
      %s25 = scalar_select %p23, %s24, %s16
      %s26 = sand.u32 %s25, 7
      %s27 = ssub.s32 0, %s26
      %s28 = scalar_select %p23, %s27, %s26
      %p29 = scmp.ne.s32.totalorder %s28, 0
      %p30 = scmp.lt.s32.totalorder %s28, 0
      %p31 = pnand %p30, %p29
      %p32 = pneg %p31
      %s33 = sadd.s32 %s28, 8
      %s34 = scalar_select %p32, %s33, %s28
      %s35 = smul.addr %s22, 16
      %s36 = scalar_lea.hbm %s1, %s35
      %s37 = scalar_lea.vmem [#allocation2], %s16
      %s38 = scalar_lea.sflag [#allocation3], %s34
      // Predicated region
      $region9: #{embedder.1} parent=5 // pred_check
        _
      $region10: #{embedder.1} parent=5 // pred_check_branch
        %40 = sbr.rel target = $region12
      $region11: #{embedder.1} parent=5 // pred_region
        %41 = sst [smem:[#allocation10]] [#allocation9]
        %42 = sst [smem:[#allocation11]] [#allocation8]
      $region12: #{embedder.1} parent=5 // pred_fallthru
        _
      %44 = shalt.err (0)
      %s46 = sshll.u32 %s37, 4
      %s47 = int_to_ptr.vmem [resolvable:$true] %s46
      %49 = dma.hbm_to_vmem [thread:$0]  %s36, 16, %s47, %s38
    $region6: #{embedder.1} parent=1 // loop_footer
      %s20 = sadd.s32 1, %s16
    $region7: #{embedder.1} parent=1 // loop_footer_branch
      %15 = sbr.rel target = $region3
    $region8: #{embedder.1} parent=1 // loop_exit
      _
    loop: start=0, step=1, limit=16
    $region13: #{embedder.1} parent=1 // loop_pre_header
      _
    $region14: #{embedder.1} parent=1 // loop_header
      %s51 = sphi 0, %s55
      %p52 = scmp.ge.s32.totalorder %s51, 16
    $region15: #{embedder.1} parent=1 // loop_header_branch
      %54 = sbr.rel (%p52) target = $region19
    $region16: #{embedder.1} parent=1 // loop_body
      %p56 = scmp.lt.s32.totalorder %s51, 0
      %s57 = ssub.s32 0, %s51
      %s58 = scalar_select %p56, %s57, %s51
      %s59 = sand.u32 %s58, 7
      %s60 = ssub.s32 0, %s59
      %s61 = scalar_select %p56, %s60, %s59
      %p62 = scmp.ne.s32.totalorder %s61, 0
      %p63 = scmp.lt.s32.totalorder %s61, 0
      %p64 = pnand %p63, %p62
      %p65 = pneg %p64
      %s66 = sadd.s32 %s61, 8
      %s67 = scalar_select %p65, %s66, %s61
      %s68 = scalar_lea.sflag [#allocation3], %s67
      %70 = dma.done %s68, 16
    $region17: #{embedder.1} parent=1 // loop_footer
      %s55 = sadd.s32 1, %s51
    $region18: #{embedder.1} parent=1 // loop_footer_branch
      %50 = sbr.rel target = $region14
    $region19: #{embedder.1} parent=1 // loop_exit
      _
    %v71 = vld [vmem:[#allocation2] sm:$0xff]
    %v72 = vld [vmem:[#allocation2 + $0x8] sm:$0xff]
    %73 = vst [vmem:[#allocation6] sm:$0xff] %v71
    %74 = vst [vmem:[#allocation6 + $0x8] sm:$0xff] %v72
    // Predicated region
    $region20: #{embedder.1} parent=1 // pred_check
      _
    $region21: #{embedder.1} parent=1 // pred_check_branch
      %76 = sbr.rel (0) target = $region23
    $region22: #{embedder.1} parent=1 // pred_region
      %s78 = ssub.s32 256, 256
      %79 = vsyncadd [#allocation7], %s78
      %s80 = sshll.u32 [#allocation6], 4
      %s81 = int_to_ptr.vmem [resolvable:$true] %s80
      %86 = dma.vmem_to_hbm [thread:$0]  %s81, 256, %s2, [#allocation7], 128, 128, 8
    $region23: #{embedder.1} parent=1 // pred_fallthru
      _
    // Predicated region
    $region24: #{embedder.1} parent=1 // pred_check
      _
    $region25: #{embedder.1} parent=1 // pred_check_branch
      %88 = sbr.rel (0) target = $region27
    $region26: #{embedder.1} parent=1 // pred_region
      %89 = dma.done [#allocation7], 256
    $region27: #{embedder.1} parent=1 // pred_fallthru
      _
    %90 = vsyncpa [#allocation7], 1
  %91 = vsyncmov [#allocation3]
  %s92 = vpop.sfrf %91
  %p93 = scmp.eq.s32.totalorder %s92, 0
  %p94 = pneg %p93
  %96 = shalt.err (%p94)
  %s97 = scalar_lea.sflag [#allocation3], 1
  %98 = vsyncmov %s97
  %s99 = vpop.sfrf %98
  %p100 = scmp.eq.s32.totalorder %s99, 0
  %p101 = pneg %p100
  %103 = shalt.err (%p101)
  %s104 = scalar_lea.sflag [#allocation3], 2
  %105 = vsyncmov %s104
  %s106 = vpop.sfrf %105
  %p107 = scmp.eq.s32.totalorder %s106, 0
  %p108 = pneg %p107
  %110 = shalt.err (%p108)
  %s111 = scalar_lea.sflag [#allocation3], 3
  %112 = vsyncmov %s111
  %s113 = vpop.sfrf %112
  %p114 = scmp.eq.s32.totalorder %s113, 0
  %p115 = pneg %p114
  %117 = shalt.err (%p115)
  %s118 = scalar_lea.sflag [#allocation3], 4
  %119 = vsyncmov %s118
  %s120 = vpop.sfrf %119
  %p121 = scmp.eq.s32.totalorder %s120, 0
  %p122 = pneg %p121
  %124 = shalt.err (%p122)
  %s125 = scalar_lea.sflag [#allocation3], 5
  %126 = vsyncmov %s125
  %s127 = vpop.sfrf %126
  %p128 = scmp.eq.s32.totalorder %s127, 0
  %p129 = pneg %p128
  %131 = shalt.err (%p129)
  %s132 = scalar_lea.sflag [#allocation3], 6
  %133 = vsyncmov %s132
  %s134 = vpop.sfrf %133
  %p135 = scmp.eq.s32.totalorder %s134, 0
  %p136 = pneg %p135
  %138 = shalt.err (%p136)
  %s139 = scalar_lea.sflag [#allocation3], 7
  %140 = vsyncmov %s139
  %s141 = vpop.sfrf %140
  %p142 = scmp.eq.s32.totalorder %s141, 0
  %p143 = pneg %p142
  %145 = shalt.err (%p143)

</llo_original>
